<compile_context>
chip_gen: v7x
topology: tpu7x:2x2x1
jax: 0.10.0
libtpu: 0.0.40
codegen_flags: <defaults>
</compile_context>

<pallas_src>
import functools

import jax
import jax.numpy as jnp
from jax.experimental import pallas as pl
from jax.experimental.pallas import tpu as pltpu


NEG_BIG = -1e30        # finite "minus infinity" (matches the pure-JAX reference)
N_CLASSES = 3
C_PAD = 8              # classifier rows padded to a sublane-friendly count


def _round_up(x, m):
    return (x + m - 1) // m * m


def _physical_vmem_bytes():
    """Per-TensorCore VMEM capacity; conservative v7x default if unknown."""
    try:
        info = pltpu.get_tpu_info()
        for attr in ("vmem_capacity_bytes", "vmem_bytes", "vmem_size_bytes"):
            v = getattr(info, attr, None)
            if v:
                return int(v)
    except Exception:
        pass
    return 64 * 1024 * 1024


def _plan(S, H):
    """VMEM-budget-aware tiling -> (vmem_limit_bytes, time_tile, fits_in_one_tile)."""
    phys = _physical_vmem_bytes()
    vmem_limit = min(phys * 3 // 4, 100 * 1024 * 1024)  # ~96MiB on 128MiB parts, 48MiB on v7x
    budget = int(vmem_limit * 0.8)                      # headroom for compiler scratch

    def step_bytes(ts):
        # Conservative per-grid-step live-VMEM model (one batch element/step):
        # double-buffered bf16 mb block + f32/bf16 activation temporaries
        # + double-buffered weights + double-buffered narrow output block.
        act = ts * H * (2 * 2 + 4 + 4 + 2 + 4)
        wts = 2 * (H * H * 2 + C_PAD * H * 2 + 3 * H * 4)
        out = 2 * N_CLASSES * ts * 4
        return act + wts + out + 4 * H + 4096

    fits = step_bytes(_round_up(max(S, 1), 8)) <= budget
    s_cap = _round_up(max(S, 1), 128)
    ts = 128
    while ts * 2 <= min(4096, s_cap) and step_bytes(ts * 2) <= budget:
        ts *= 2
    return vmem_limit, ts, fits


# ---------------------------------------------------------------------------
# Pass 1 (tiled path): masked additive-attention pooling, online softmax over
# time tiles.  Grid = (batch [parallel], time tiles [arbitrary reduction]).
# ---------------------------------------------------------------------------
def _attn_pool_kernel(bv_ref, len_ref, mb_ref, wat_ref, bat_ref, vat_ref,
                      g_ref, m_sc, l_sc, acc_sc):
    bi = pl.program_id(0)
    ti = pl.program_id(1)
    ts = mb_ref.shape[2]

    @pl.when(ti == 0)
    def _init():
        m_sc[...] = jnp.full_like(m_sc, NEG_BIG)
        l_sc[...] = jnp.zeros_like(l_sc)
        acc_sc[...] = jnp.zeros_like(acc_sc)

    mb = mb_ref[0]                                       # (H, ts) bf16, read once
    # scores[t] = v . tanh(W x_t + b) + bv  (bf16 MXU operands, f32 accumulate)
    pre = jnp.dot(wat_ref[...], mb,
                  preferred_element_type=jnp.float32) + bat_ref[...]
    scores = (jnp.sum(jnp.tanh(pre) * vat_ref[...], axis=0, keepdims=True)
              + bv_ref[0])                               # (1, ts), time on lanes

    # length mask (also masks padded time positions at the end of the array).
    t = ti * ts + jax.lax.broadcasted_iota(jnp.int32, scores.shape, 1)
    scores = jnp.where(t < len_ref[bi], scores, NEG_BIG)

    # online-softmax update across time tiles (statistics kept in f32).
    m_prev = m_sc[...]
    m_new = jnp.maximum(m_prev, jnp.max(scores, axis=1, keepdims=True))
    corr = jnp.exp(m_prev - m_new)
    p = jnp.exp(scores - m_new)                          # (1, ts)
    l_sc[...] = corr * l_sc[...] + jnp.sum(p, axis=1, keepdims=True)
    acc_sc[...] = (corr * acc_sc[...]
                   + jnp.sum(mb.astype(jnp.float32) * p, axis=1, keepdims=True))
    m_sc[...] = m_new

    @pl.when(ti == pl.num_programs(1) - 1)
    def _finalize():
        g_ref[0] = acc_sc[...] / l_sc[...]               # exact reciprocal, once per batch


# ---------------------------------------------------------------------------
# Pass 2 (tiled path): states = relu(W_sni (mb * g) + b), 3-way classifier,
# log_softmax over exactly 3 logits, lane-dense (3, ts) stores.
# ---------------------------------------------------------------------------
def _sni_head_kernel(mb_ref, g_ref, wsni_ref, bsni_ref, wout_ref, bout_ref,
                     out_ref):
    mb = mb_ref[0]                                       # (H, ts) bf16
    g = g_ref[0]                                         # (H, 1) f32
    x = (mb.astype(jnp.float32) * g).astype(jnp.bfloat16)
    st = jnp.maximum(
        jnp.dot(wsni_ref[...], x, preferred_element_type=jnp.float32)
        + bsni_ref[...], 0.0)
    logits = (jnp.dot(wout_ref[...], st.astype(jnp.bfloat16),
                      preferred_element_type=jnp.float32) + bout_ref[...])  # (8, ts)
    l0 = logits[0:1, :]
    l1 = logits[1:2, :]
    l2 = logits[2:3, :]
    m = jnp.maximum(jnp.maximum(l0, l1), l2)
    lse = jnp.log(jnp.exp(l0 - m) + jnp.exp(l1 - m) + jnp.exp(l2 - m)) + m
    out_ref[0] = logits[0:N_CLASSES, :] - lse            # (3, ts)


# ---------------------------------------------------------------------------
# Fused fast path: whole (H, S) slab of one batch element fits VMEM, so the
# attention pooling and the SNI head run in one kernel (memory_bank read once).
# ---------------------------------------------------------------------------
def _fused_kernel(bv_ref, len_ref, mb_ref, wat_ref, bat_ref, vat_ref,
                  wsni_ref, bsni_ref, wout_ref, bout_ref, out_ref):
    bi = pl.program_id(0)
    mb = mb_ref[0]                                       # (H, S) bf16
    mbf = mb.astype(jnp.float32)

    pre = jnp.dot(wat_ref[...], mb,
                  preferred_element_type=jnp.float32) + bat_ref[...]
    scores = (jnp.sum(jnp.tanh(pre) * vat_ref[...], axis=0, keepdims=True)
              + bv_ref[0])
    t = jax.lax.broadcasted_iota(jnp.int32, scores.shape, 1)
    scores = jnp.where(t < len_ref[bi], scores, NEG_BIG)

    m = jnp.max(scores, axis=1, keepdims=True)
    p = jnp.exp(scores - m)
    l = jnp.sum(p, axis=1, keepdims=True)
    g = jnp.sum(mbf * p, axis=1, keepdims=True) / l      # (H, 1) f32

    x = (mbf * g).astype(jnp.bfloat16)
    st = jnp.maximum(
        jnp.dot(wsni_ref[...], x, preferred_element_type=jnp.float32)
        + bsni_ref[...], 0.0)
    logits = (jnp.dot(wout_ref[...], st.astype(jnp.bfloat16),
                      preferred_element_type=jnp.float32) + bout_ref[...])
    l0 = logits[0:1, :]
    l1 = logits[1:2, :]
    l2 = logits[2:3, :]
    mm = jnp.maximum(jnp.maximum(l0, l1), l2)
    lse = jnp.log(jnp.exp(l0 - mm) + jnp.exp(l1 - mm) + jnp.exp(l2 - mm)) + mm
    out_ref[0] = logits[0:N_CLASSES, :] - lse


@functools.partial(jax.jit, static_argnames=("force_two_pass",))
def sni_layer(memory_bank, lengths, params, force_two_pass=False):
    S, B, H = memory_bank.shape
    vmem_limit, ts, fits_vmem = _plan(S, H)
    use_fused = fits_vmem and not force_two_pass

    lengths_i = lengths.reshape(B).astype(jnp.int32)
    bv = params["bv"].reshape(1).astype(jnp.float32)
    # Column-major (transposed) weights: out_col = W^T @ x_col.
    wat = params["w_attn"].T.astype(jnp.bfloat16)               # (H, H)
    bat = params["b_attn"].reshape(H, 1).astype(jnp.float32)
    vat = params["v_attn"].reshape(H, 1).astype(jnp.float32)
    wsni = params["w_sni"].T.astype(jnp.bfloat16)               # (H, H)
    bsni = params["b_sni"].reshape(H, 1).astype(jnp.float32)
    wout = jnp.zeros((C_PAD, H), jnp.bfloat16).at[:N_CLASSES, :].set(
        params["w_out"].T.astype(jnp.bfloat16))
    bout = jnp.zeros((C_PAD, 1), jnp.float32).at[:N_CLASSES, :].set(
        params["b_out"].reshape(N_CLASSES, 1).astype(jnp.float32))

    # Single fused transpose+cast: (S, B, H) f32 -> (B, H, S) bf16.  Time on the
    # lane axis keeps every softmax op and every store lane-dense and halves
    # the bf16 streaming traffic of both kernel passes.
    mb_bhs = jnp.transpose(memory_bank, (1, 2, 0)).astype(jnp.bfloat16)

    if use_fused:
        out = pl.pallas_call(
            _fused_kernel,
            out_shape=jax.ShapeDtypeStruct((B, N_CLASSES, S), jnp.float32),
            grid_spec=pltpu.PrefetchScalarGridSpec(
                num_scalar_prefetch=0,
                grid=(B,),
                in_specs=[
                    pl.BlockSpec(memory_space=pltpu.MemorySpace.SMEM),   # bv
                    pl.BlockSpec(memory_space=pltpu.MemorySpace.SMEM),   # lengths
                    pl.BlockSpec((1, H, S), lambda b: (b, 0, 0)),        # memory_bank
                    pl.BlockSpec((H, H), lambda b: (0, 0)),              # w_attn^T
                    pl.BlockSpec((H, 1), lambda b: (0, 0)),              # b_attn
                    pl.BlockSpec((H, 1), lambda b: (0, 0)),              # v_attn
                    pl.BlockSpec((H, H), lambda b: (0, 0)),              # w_sni^T
                    pl.BlockSpec((H, 1), lambda b: (0, 0)),              # b_sni
                    pl.BlockSpec((C_PAD, H), lambda b: (0, 0)),          # w_out^T (padded)
                    pl.BlockSpec((C_PAD, 1), lambda b: (0, 0)),          # b_out (padded)
                ],
                out_specs=pl.BlockSpec((1, N_CLASSES, S), lambda b: (b, 0, 0)),
            ),
            compiler_params=pltpu.CompilerParams(
                dimension_semantics=("parallel",),
                vmem_limit_bytes=vmem_limit),
        )(bv, lengths_i, mb_bhs, wat, bat, vat, wsni, bsni, wout, bout)
    else:
        S_pad = _round_up(S, ts)
        if S_pad != S:
            mb_bhs = jnp.pad(mb_bhs, ((0, 0), (0, 0), (0, S_pad - S)))
        n_t = S_pad // ts

        # ---- pass 1: global attention vector g, shape (B, H, 1) -------------
        g = pl.pallas_call(
            _attn_pool_kernel,
            out_shape=jax.ShapeDtypeStruct((B, H, 1), jnp.float32),
            grid_spec=pltpu.PrefetchScalarGridSpec(
                num_scalar_prefetch=0,
                grid=(B, n_t),
                in_specs=[
                    pl.BlockSpec(memory_space=pltpu.MemorySpace.SMEM),   # bv
                    pl.BlockSpec(memory_space=pltpu.MemorySpace.SMEM),   # lengths
                    pl.BlockSpec((1, H, ts), lambda b, t: (b, 0, t)),    # memory_bank
                    pl.BlockSpec((H, H), lambda b, t: (0, 0)),           # w_attn^T
                    pl.BlockSpec((H, 1), lambda b, t: (0, 0)),           # b_attn
                    pl.BlockSpec((H, 1), lambda b, t: (0, 0)),           # v_attn
                ],
                out_specs=pl.BlockSpec((1, H, 1), lambda b, t: (b, 0, 0)),
                scratch_shapes=[
                    pltpu.VMEM((1, 1), jnp.float32),    # running max
                    pltpu.VMEM((1, 1), jnp.float32),    # running normalizer
                    pltpu.VMEM((H, 1), jnp.float32),    # unnormalized weighted sum
                ],
            ),
            compiler_params=pltpu.CompilerParams(
                dimension_semantics=("parallel", "arbitrary"),
                vmem_limit_bytes=vmem_limit),
        )(bv, lengths_i, mb_bhs, wat, bat, vat)

        # ---- pass 2: per-tile SNI head, fully parallel -----------------------
        out = pl.pallas_call(
            _sni_head_kernel,
            out_shape=jax.ShapeDtypeStruct((B, N_CLASSES, S_pad), jnp.float32),
            grid_spec=pltpu.PrefetchScalarGridSpec(
                num_scalar_prefetch=0,
                grid=(B, n_t),
                in_specs=[
                    pl.BlockSpec((1, H, ts), lambda b, t: (b, 0, t)),    # memory_bank
                    pl.BlockSpec((1, H, 1), lambda b, t: (b, 0, 0)),     # g
                    pl.BlockSpec((H, H), lambda b, t: (0, 0)),           # w_sni^T
                    pl.BlockSpec((H, 1), lambda b, t: (0, 0)),           # b_sni
                    pl.BlockSpec((C_PAD, H), lambda b, t: (0, 0)),       # w_out^T (padded)
                    pl.BlockSpec((C_PAD, 1), lambda b, t: (0, 0)),       # b_out (padded)
                ],
                out_specs=pl.BlockSpec((1, N_CLASSES, ts), lambda b, t: (b, 0, t)),
            ),
            compiler_params=pltpu.CompilerParams(
                dimension_semantics=("parallel", "parallel"),
                vmem_limit_bytes=vmem_limit),
        )(mb_bhs, g, wsni, bsni, wout, bout)
        out = out[:, :, :S]

    # (B, 3, S) -> (S, B, 3) -> (S*B, 3): matches torch `states.view(-1, H)`
    # row order (time-major: row = t*B + b).
    return jnp.transpose(out, (2, 0, 1)).reshape(S * B, N_CLASSES)


def init_params(key, H):
    # PyTorch Linear default init: U(-1/sqrt(fan_in), 1/sqrt(fan_in)).
    ks = jax.random.split(key, 8)
    bound = 1.0 / jnp.sqrt(H)
    u = lambda k, shape: jax.random.uniform(k, shape, jnp.float32, -bound, bound)
    return {
        # weights stored for the row-vector convention: y = x @ W + b
        "w_attn": u(ks[0], (H, H)), "b_attn": u(ks[1], (1, H)),
        "v_attn": u(ks[2], (H, 1)), "bv":     u(ks[3], (1, 1)),
        "w_sni":  u(ks[4], (H, H)), "b_sni":  u(ks[5], (1, H)),
        "w_out":  u(ks[6], (H, 3)), "b_out":  u(ks[7], (1, 3)),
    }


def sni_layer_ref(memory_bank, lengths, p):
    # pure-JAX f32 reference for correctness checking
    S, B, H = memory_bank.shape
    x = memory_bank.reshape(S * B, H)
    h = jnp.tanh(x @ p["w_attn"] + p["b_attn"])
    scores = (h @ p["v_attn"] + p["bv"]).reshape(S, B)
    t = jnp.arange(S)[:, None]
    scores = jnp.where(t < lengths[None, :], scores, NEG_BIG)
    alpha = jax.nn.softmax(scores, axis=0)
    g = jnp.sum(alpha[:, :, None] * memory_bank, axis=0)
    states = memory_bank * g[None, :, :]
    states = jax.nn.relu(states.reshape(S * B, H) @ p["w_sni"] + p["b_sni"])
    logits = states @ p["w_out"] + p["b_out"]
    return jax.nn.log_softmax(logits, axis=-1)


if __name__ == "__main__":
    key = jax.random.PRNGKey(0)
    k_mb, k_p, k_mb2 = jax.random.split(key, 3)

    # --- small case: exercises the fused single-kernel fast path -------------
    S, B, H = 8, 2, 32   # seq=8, batch=2, enc_rnn_size=32
    memory_bank = jax.random.normal(k_mb, (S, B, H), jnp.float32)
    lengths = jnp.array([8, 5], dtype=jnp.int32)
    params = init_params(k_p, H)

    out = jax.block_until_ready(sni_layer(memory_bank, lengths, params))
    ref = sni_layer_ref(memory_bank, lengths, params)
    assert out.shape == (S * B, 3)
    # bf16 streamed inputs + bf16 MXU operands -> looser tolerance than pure f32.
    assert jnp.allclose(out, ref, atol=5e-2, rtol=5e-2), "fused path mismatch"

    # --- larger case: forces the tiled two-pass online-softmax path ----------
    S2, B2 = 384, 3
    mb2 = jax.random.normal(k_mb2, (S2, B2, H), jnp.float32)
    lengths2 = jnp.array([384, 200, 7], dtype=jnp.int32)
    out2 = jax.block_until_ready(
        sni_layer(mb2, lengths2, params, force_two_pass=True))
    ref2 = sni_layer_ref(mb2, lengths2, params)
    assert out2.shape == (S2 * B2, 3)
    assert jnp.allclose(out2, ref2, atol=5e-2, rtol=5e-2), "tiled path mismatch"

    print("KERNEL_OK")
</pallas_src>

<mosaic_0001>
module attributes {stable_mosaic.version = 11 : i64} {
  func.func @_fused_kernel(%arg0: i32, %arg1: memref<1xf32, #tpu.memory_space<smem>>, %arg2: memref<2xi32, #tpu.memory_space<smem>>, %arg3: memref<1x32x8xbf16, #tpu.memory_space<vmem>>, %arg4: memref<32x32xbf16, #tpu.memory_space<vmem>>, %arg5: memref<32x1xf32, #tpu.memory_space<vmem>>, %arg6: memref<32x1xf32, #tpu.memory_space<vmem>>, %arg7: memref<32x32xbf16, #tpu.memory_space<vmem>>, %arg8: memref<32x1xf32, #tpu.memory_space<vmem>>, %arg9: memref<8x32xbf16, #tpu.memory_space<vmem>>, %arg10: memref<8x1xf32, #tpu.memory_space<vmem>>, %arg11: memref<1x3x8xf32, #tpu.memory_space<vmem>>) attributes {dimension_semantics = [#tpu.dimension_semantics<parallel>], iteration_bounds = array<i64: 2>, scalar_prefetch = 0 : i64, scratch_operands = 0 : i64, tpu.core_type = #tpu.core_type<tc>, window_params = [{transform_indices = @transform_0, window_bounds = array<i64: 1>}, {transform_indices = @transform_1, window_bounds = array<i64: 2>}, {transform_indices = @transform_2, window_bounds = array<i64: 1, 32, 8>}, {pipeline_mode = #tpu.pipeline_mode<synchronous>, transform_indices = @transform_3, window_bounds = array<i64: 32, 32>}, {pipeline_mode = #tpu.pipeline_mode<synchronous>, transform_indices = @transform_4, window_bounds = array<i64: 32, 1>}, {pipeline_mode = #tpu.pipeline_mode<synchronous>, transform_indices = @transform_5, window_bounds = array<i64: 32, 1>}, {pipeline_mode = #tpu.pipeline_mode<synchronous>, transform_indices = @transform_6, window_bounds = array<i64: 32, 32>}, {pipeline_mode = #tpu.pipeline_mode<synchronous>, transform_indices = @transform_7, window_bounds = array<i64: 32, 1>}, {pipeline_mode = #tpu.pipeline_mode<synchronous>, transform_indices = @transform_8, window_bounds = array<i64: 8, 32>}, {pipeline_mode = #tpu.pipeline_mode<synchronous>, transform_indices = @transform_9, window_bounds = array<i64: 8, 1>}, {transform_indices = @transform_10, window_bounds = array<i64: 1, 3, 8>}]} {
    %c0 = arith.constant 0 : index
    %c0_0 = arith.constant 0 : index
    %c0_1 = arith.constant 0 : index
    %0 = vector.load %arg3[%c0, %c0_0, %c0_1] : memref<1x32x8xbf16, #tpu.memory_space<vmem>>, vector<1x32x8xbf16>
    %1 = vector.shape_cast %0 : vector<1x32x8xbf16> to vector<32x8xbf16>
    %2 = arith.extf %1 : vector<32x8xbf16> to vector<32x8xf32>
    %c0_2 = arith.constant 0 : index
    %c0_3 = arith.constant 0 : index
    %3 = vector.load %arg4[%c0_2, %c0_3] : memref<32x32xbf16, #tpu.memory_space<vmem>>, vector<32x32xbf16>
    %cst = arith.constant dense<0.000000e+00> : vector<32x8xf32>
    %4 = tpu.matmul %3, %1, %cst {dimension_numbers = #tpu.dot_dimension_numbers<[1], [0], [0], [1], [0, 0, 1, 1], [], []>} : vector<32x32xbf16>, vector<32x8xbf16>, vector<32x8xf32> -> vector<32x8xf32>
    %c0_4 = arith.constant 0 : index
    %c0_5 = arith.constant 0 : index
    %5 = vector.load %arg5[%c0_4, %c0_5] : memref<32x1xf32, #tpu.memory_space<vmem>>, vector<32x1xf32>
    %6 = vector.broadcast %5 : vector<32x1xf32> to vector<32x8xf32>
    %7 = arith.addf %4, %6 : vector<32x8xf32>
    %8 = math.tanh %7 : vector<32x8xf32>
    %c0_6 = arith.constant 0 : index
    %c0_7 = arith.constant 0 : index
    %9 = vector.load %arg6[%c0_6, %c0_7] : memref<32x1xf32, #tpu.memory_space<vmem>>, vector<32x1xf32>
    %10 = vector.broadcast %9 : vector<32x1xf32> to vector<32x8xf32>
    %11 = arith.mulf %8, %10 : vector<32x8xf32>
    %cst_8 = arith.constant dense<0.000000e+00> : vector<8xf32>
    %12 = vector.multi_reduction <add>, %11, %cst_8 [0] : vector<32x8xf32> to vector<8xf32>
    %13 = vector.shape_cast %12 : vector<8xf32> to vector<1x8xf32>
    %c0_9 = arith.constant 0 : index
    %14 = memref.load %arg1[%c0_9] : memref<1xf32, #tpu.memory_space<smem>>
    %15 = vector.broadcast %14 : f32 to vector<1x8xf32>
    %16 = arith.addf %13, %15 : vector<1x8xf32>
    %17 = tpu.iota {dimensions = array<i32: 1>} : vector<1x8xi32>
    %18 = arith.index_cast %arg0 : i32 to index
    %19 = memref.load %arg2[%18] : memref<2xi32, #tpu.memory_space<smem>>
    %20 = vector.broadcast %19 : i32 to vector<1x8xi32>
    %21 = arith.cmpi slt, %17, %20 : vector<1x8xi32>
    %cst_10 = arith.constant -1.000000e+30 : f32
    %22 = vector.broadcast %cst_10 : f32 to vector<1x8xf32>
    %23 = arith.select %21, %16, %22 : vector<1x8xi1>, vector<1x8xf32>
    %cst_11 = arith.constant dense<0xFF800000> : vector<1xf32>
    %24 = vector.multi_reduction <maximumf>, %23, %cst_11 [1] : vector<1x8xf32> to vector<1xf32>
    %25 = vector.shape_cast %24 : vector<1xf32> to vector<1x1xf32>
    %26 = vector.broadcast %25 : vector<1x1xf32> to vector<1x8xf32>
    %27 = arith.subf %23, %26 : vector<1x8xf32>
    %28 = math.exp %27 : vector<1x8xf32>
    %cst_12 = arith.constant dense<0.000000e+00> : vector<1xf32>
    %29 = vector.multi_reduction <add>, %28, %cst_12 [1] : vector<1x8xf32> to vector<1xf32>
    %30 = vector.shape_cast %29 : vector<1xf32> to vector<1x1xf32>
    %31 = vector.broadcast %28 : vector<1x8xf32> to vector<32x8xf32>
    %32 = arith.mulf %2, %31 : vector<32x8xf32>
    %cst_13 = arith.constant dense<0.000000e+00> : vector<32xf32>
    %33 = vector.multi_reduction <add>, %32, %cst_13 [1] : vector<32x8xf32> to vector<32xf32>
    %34 = vector.shape_cast %33 : vector<32xf32> to vector<32x1xf32>
    %35 = vector.broadcast %30 : vector<1x1xf32> to vector<32x1xf32>
    %36 = arith.divf %34, %35 : vector<32x1xf32>
    %37 = vector.broadcast %36 : vector<32x1xf32> to vector<32x8xf32>
    %38 = arith.mulf %2, %37 : vector<32x8xf32>
    %39 = arith.truncf %38 : vector<32x8xf32> to vector<32x8xbf16>
    %c0_14 = arith.constant 0 : index
    %c0_15 = arith.constant 0 : index
    %40 = vector.load %arg7[%c0_14, %c0_15] : memref<32x32xbf16, #tpu.memory_space<vmem>>, vector<32x32xbf16>
    %cst_16 = arith.constant dense<0.000000e+00> : vector<32x8xf32>
    %41 = tpu.matmul %40, %39, %cst_16 {dimension_numbers = #tpu.dot_dimension_numbers<[1], [0], [0], [1], [0, 0, 1, 1], [], []>} : vector<32x32xbf16>, vector<32x8xbf16>, vector<32x8xf32> -> vector<32x8xf32>
    %c0_17 = arith.constant 0 : index
    %c0_18 = arith.constant 0 : index
    %42 = vector.load %arg8[%c0_17, %c0_18] : memref<32x1xf32, #tpu.memory_space<vmem>>, vector<32x1xf32>
    %43 = vector.broadcast %42 : vector<32x1xf32> to vector<32x8xf32>
    %44 = arith.addf %41, %43 : vector<32x8xf32>
    %cst_19 = arith.constant 0.000000e+00 : f32
    %45 = vector.broadcast %cst_19 : f32 to vector<32x8xf32>
    %46 = arith.maximumf %44, %45 : vector<32x8xf32>
    %c0_20 = arith.constant 0 : index
    %c0_21 = arith.constant 0 : index
    %47 = vector.load %arg9[%c0_20, %c0_21] : memref<8x32xbf16, #tpu.memory_space<vmem>>, vector<8x32xbf16>
    %48 = arith.truncf %46 : vector<32x8xf32> to vector<32x8xbf16>
    %cst_22 = arith.constant dense<0.000000e+00> : vector<8x8xf32>
    %49 = tpu.matmul %47, %48, %cst_22 {dimension_numbers = #tpu.dot_dimension_numbers<[1], [0], [0], [1], [0, 0, 1, 1], [], []>} : vector<8x32xbf16>, vector<32x8xbf16>, vector<8x8xf32> -> vector<8x8xf32>
    %c0_23 = arith.constant 0 : index
    %c0_24 = arith.constant 0 : index
    %50 = vector.load %arg10[%c0_23, %c0_24] : memref<8x1xf32, #tpu.memory_space<vmem>>, vector<8x1xf32>
    %51 = vector.broadcast %50 : vector<8x1xf32> to vector<8x8xf32>
    %52 = arith.addf %49, %51 : vector<8x8xf32>
    %53 = vector.extract_strided_slice %52 {offsets = [0, 0], sizes = [1, 8], strides = [1, 1]} : vector<8x8xf32> to vector<1x8xf32>
    %54 = vector.extract_strided_slice %52 {offsets = [1, 0], sizes = [1, 8], strides = [1, 1]} : vector<8x8xf32> to vector<1x8xf32>
    %55 = vector.extract_strided_slice %52 {offsets = [2, 0], sizes = [1, 8], strides = [1, 1]} : vector<8x8xf32> to vector<1x8xf32>
    %56 = arith.maximumf %53, %54 : vector<1x8xf32>
    %57 = arith.maximumf %56, %55 : vector<1x8xf32>
    %58 = arith.subf %53, %57 : vector<1x8xf32>
    %59 = math.exp %58 : vector<1x8xf32>
    %60 = arith.subf %54, %57 : vector<1x8xf32>
    %61 = math.exp %60 : vector<1x8xf32>
    %62 = arith.addf %59, %61 : vector<1x8xf32>
    %63 = arith.subf %55, %57 : vector<1x8xf32>
    %64 = math.exp %63 : vector<1x8xf32>
    %65 = arith.addf %62, %64 : vector<1x8xf32>
    %66 = math.log %65 : vector<1x8xf32>
    %67 = arith.addf %66, %57 : vector<1x8xf32>
    %68 = vector.extract_strided_slice %52 {offsets = [0, 0], sizes = [3, 8], strides = [1, 1]} : vector<8x8xf32> to vector<3x8xf32>
    %69 = vector.broadcast %67 : vector<1x8xf32> to vector<3x8xf32>
    %70 = arith.subf %68, %69 : vector<3x8xf32>
    %c0_25 = arith.constant 0 : index
    %c0_26 = arith.constant 0 : index
    %c0_27 = arith.constant 0 : index
    %71 = vector.load %arg11[%c0_25, %c0_26, %c0_27] : memref<1x3x8xf32, #tpu.memory_space<vmem>>, vector<1x3x8xf32>
    %72 = vector.shape_cast %71 : vector<1x3x8xf32> to vector<3x8xf32>
    %73 = vector.shape_cast %70 : vector<3x8xf32> to vector<1x3x8xf32>
    tpu.vector_store %arg11[%c0_25, %c0_26, %c0_27], %73 {strides = array<i32>} : memref<1x3x8xf32, #tpu.memory_space<vmem>>, vector<1x3x8xf32>,
    return
  }
  func.func @transform_0(%arg0: i32) -> i32 {
    %c0_i32 = arith.constant 0 : i32
    %c0_i32_0 = arith.constant 0 : i32
    return %c0_i32 : i32
  }
  func.func @transform_1(%arg0: i32) -> i32 {
    %c0_i32 = arith.constant 0 : i32
    %c0_i32_0 = arith.constant 0 : i32
    return %c0_i32 : i32
  }
  func.func @transform_2(%arg0: i32) -> (i32, i32, i32) {
    %c0_i32 = arith.constant 0 : i32
    %c0_i32_0 = arith.constant 0 : i32
    %c0_i32_1 = arith.constant 0 : i32
    return %arg0, %c0_i32, %c0_i32_0 : i32, i32, i32
  }
  func.func @transform_3(%arg0: i32) -> (i32, i32) {
    %c0_i32 = arith.constant 0 : i32
    %c0_i32_0 = arith.constant 0 : i32
    %c0_i32_1 = arith.constant 0 : i32
    return %c0_i32, %c0_i32_0 : i32, i32
  }
  func.func @transform_4(%arg0: i32) -> (i32, i32) {
    %c0_i32 = arith.constant 0 : i32
    %c0_i32_0 = arith.constant 0 : i32
    %c0_i32_1 = arith.constant 0 : i32
    return %c0_i32, %c0_i32_0 : i32, i32
  }
  func.func @transform_5(%arg0: i32) -> (i32, i32) {
    %c0_i32 = arith.constant 0 : i32
    %c0_i32_0 = arith.constant 0 : i32
    %c0_i32_1 = arith.constant 0 : i32
    return %c0_i32, %c0_i32_0 : i32, i32
  }
  func.func @transform_6(%arg0: i32) -> (i32, i32) {
    %c0_i32 = arith.constant 0 : i32
    %c0_i32_0 = arith.constant 0 : i32
    %c0_i32_1 = arith.constant 0 : i32
    return %c0_i32, %c0_i32_0 : i32, i32
  }
  func.func @transform_7(%arg0: i32) -> (i32, i32) {
    %c0_i32 = arith.constant 0 : i32
    %c0_i32_0 = arith.constant 0 : i32
    %c0_i32_1 = arith.constant 0 : i32
    return %c0_i32, %c0_i32_0 : i32, i32
  }
  func.func @transform_8(%arg0: i32) -> (i32, i32) {
    %c0_i32 = arith.constant 0 : i32
    %c0_i32_0 = arith.constant 0 : i32
    %c0_i32_1 = arith.constant 0 : i32
    return %c0_i32, %c0_i32_0 : i32, i32
  }
  func.func @transform_9(%arg0: i32) -> (i32, i32) {
    %c0_i32 = arith.constant 0 : i32
    %c0_i32_0 = arith.constant 0 : i32
    %c0_i32_1 = arith.constant 0 : i32
    return %c0_i32, %c0_i32_0 : i32, i32
  }
  func.func @transform_10(%arg0: i32) -> (i32, i32, i32) {
    %c0_i32 = arith.constant 0 : i32
    %c0_i32_0 = arith.constant 0 : i32
    %c0_i32_1 = arith.constant 0 : i32
    return %arg0, %c0_i32, %c0_i32_0 : i32, i32, i32
  }
}

</mosaic_0001>

<llo_original>
// kernel: sni_layer.1
$region0: #{sni_layer.1}
  #allocation0 [shape = 'u32[]', space=smem, size = 0x4, offset = 0x4, fixed_abs, tag = 'smem constant byte address 0x4 - core index']
  #allocation1 [shape = 'u32[144,128]{1,0:T(1,128)}', space=vmem, size = 0x12000, scoped, tag = 'internal scratch']
  #allocation2 [shape = 'f32[1]{0:T(128)S(6)}', space=smem, size = 0x200, scoped, tag = 'scoped memory for sni_layer.1']
  %s0 = inlined_call_operand.<no memory space> [shape: f32[1], index: 0, kind: input, shape index: {}]
  %s1 = inlined_call_operand.vmem [shape: s32[2], index: 1, kind: input, shape index: {}]
  %s2 = inlined_call_operand.vmem [shape: bf16[2,32,8], index: 2, kind: input, shape index: {}]
  %s3 = inlined_call_operand.vmem [shape: bf16[32,32], index: 3, kind: input, shape index: {}]
  %s4 = inlined_call_operand.vmem [shape: f32[32,1], index: 4, kind: input, shape index: {}]
  %s5 = inlined_call_operand.vmem [shape: f32[32,1], index: 5, kind: input, shape index: {}]
  %s6 = inlined_call_operand.vmem [shape: bf16[32,32], index: 6, kind: input, shape index: {}]
  %s7 = inlined_call_operand.vmem [shape: f32[32,1], index: 7, kind: input, shape index: {}]
  %s8 = inlined_call_operand.vmem [shape: bf16[8,32], index: 8, kind: input, shape index: {}]
  %s9 = inlined_call_operand.vmem [shape: f32[8,1], index: 9, kind: input, shape index: {}]
  %s10 = inlined_call_operand.vmem [shape: f32[2,3,8], index: 10, kind: output, shape index: {}]
  %s11 = sld [smem:[#allocation0]]
  $region77: #{sni_layer.1} parent=0
    _
  %s13 = ssub.s32 1, %s11
  %s14 = scalar_select 0, %s13, %s11
  %15 = sst [smem:[#allocation2]] %s0
  $region1: #{sni_layer.1} parent=0
    #allocation3 [shape = 'u8[512]{0}', space=smem, size = 0x200, scoped, tag = 'input window, operand 1, single buffered']
    #allocation4 [shape = 's32[2]{0}', space=sflag, size = 0x8, scoped, tag = 'scoped memory for sni_layer.1']
    %16 = vsyncpa [#allocation4], 0
    loop: start=0, step=1, limit=4
    $region2: #{sni_layer.1} parent=1 // loop_pre_header
      _
    $region3: #{sni_layer.1} parent=1 // loop_header
      %s18 = sphi 0, %s22
      %p19 = scmp.ge.s32.totalorder %s18, 4
      %s26 = sphi 0, %s26
      %s28 = sphi 0, %s26
      %s29 = sphi 0, %s28
      %s43 = sphi 0, %s29
      %s47 = sphi 0, %s47
      %s49 = sphi 0, %s47
      %s50 = sphi 0, %s49
      %s64 = sphi 0, %s50
      %s70 = sphi 0, %s72
      %s73 = sphi 0, %s70
      %s74 = sphi 0, %s73
      %s90 = sphi 0, %s74
      %s94 = sphi 0, %s94
      %s96 = sphi 0, %s94
      %s97 = sphi 0, %s96
      %s111 = sphi 0, %s97
      %s115 = sphi 0, %s115
      %s117 = sphi 0, %s115
      %s118 = sphi 0, %s117
      %s132 = sphi 0, %s118
      %s136 = sphi 0, %s136
      %s138 = sphi 0, %s136
      %s139 = sphi 0, %s138
      %s153 = sphi 0, %s139
      %s157 = sphi 0, %s157
      %s159 = sphi 0, %s157
      %s160 = sphi 0, %s159
      %s174 = sphi 0, %s160
      %s178 = sphi 0, %s178
      %s180 = sphi 0, %s178
      %s181 = sphi 0, %s180
      %s195 = sphi 0, %s181
      %s199 = sphi 0, %s199
      %s201 = sphi 0, %s199
      %s202 = sphi 0, %s201
      %s216 = sphi 0, %s202
      %s220 = sphi 0, %s220
      %s222 = sphi 0, %s220
      %s223 = sphi 0, %s222
      %s237 = sphi 0, %s223
      %s243 = sphi 0, %s245
      %s246 = sphi 0, %s243
      %s247 = sphi 0, %s246
      %s263 = sphi 0, %s247
    $region4: #{sni_layer.1} parent=1 // loop_header_branch
      %21 = sbr.rel (%p19) target = $region8
    $region5: #{sni_layer.1} parent=1 // loop_body
      %s23 = ssub.s32 %s18, 1
      %s24 = ssub.s32 %s18, 2
      %s25 = sadd.s32 %s18, 1
      %s27 = sadd.s32 %s26, 1
      %p30 = scmp.eq.s32.totalorder %s18, 1
      %p31 = scmp.ne.s32.totalorder %s26, %s28
      %p32 = scmp.eq.s32.totalorder %s18, 0
      %p33 = por %p31, %p32
      %p34 = scmp.ne.s32.totalorder %s26, %s28
      %p35 = scmp.eq.s32.totalorder %s23, 1
      %p36 = por %p34, %p35
      %p37 = scmp.ne.s32.totalorder %s28, %s29
      %p38 = scmp.eq.s32.totalorder %s23, 0
      %p39 = por %p37, %p38
      %p40 = scmp.ne.s32.totalorder %s28, %s29
      %p41 = scmp.eq.s32.totalorder %s24, 1
      %p42 = por %p40, %p41
      %p44 = scmp.ne.s32.totalorder %s29, %s43
      %p45 = scmp.eq.s32.totalorder %s24, 0
      %p46 = por %p44, %p45
      %s48 = sadd.s32 %s47, 1
      %p51 = scmp.eq.s32.totalorder %s18, 1
      %p52 = scmp.ne.s32.totalorder %s47, %s49
      %p53 = scmp.eq.s32.totalorder %s18, 0
      %p54 = por %p52, %p53
      %p55 = scmp.ne.s32.totalorder %s47, %s49
      %p56 = scmp.eq.s32.totalorder %s23, 1
      %p57 = por %p55, %p56
      %p58 = scmp.ne.s32.totalorder %s49, %s50
      %p59 = scmp.eq.s32.totalorder %s23, 0
      %p60 = por %p58, %p59
      %p61 = scmp.ne.s32.totalorder %s49, %s50
      %p62 = scmp.eq.s32.totalorder %s24, 1
      %p63 = por %p61, %p62
      %p65 = scmp.ne.s32.totalorder %s50, %s64
      %p66 = scmp.eq.s32.totalorder %s24, 0
      %p67 = por %p65, %p66
      %s68 = ssub.s32 %s18, %s25
      %p69 = scmp.eq.s32.totalorder %s68, 0
      %s71 = sadd.s32 %s70, 1
      %s72 = scalar_select %p69, %s70, %s71
      %p75 = pneg %p69
      %p76 = scmp.eq.s32.totalorder %s18, 1
      %p77 = por %p75, %p76
      %p78 = scmp.ne.s32.totalorder %s70, %s73
      %p79 = scmp.eq.s32.totalorder %s18, 0
      %p80 = por %p78, %p79
      %p81 = scmp.ne.s32.totalorder %s70, %s73
      %p82 = scmp.eq.s32.totalorder %s23, 1
      %p83 = por %p81, %p82
      %p84 = scmp.ne.s32.totalorder %s73, %s74
      %p85 = scmp.eq.s32.totalorder %s23, 0
      %p86 = por %p84, %p85
      %p87 = scmp.ne.s32.totalorder %s73, %s74
      %p88 = scmp.eq.s32.totalorder %s24, 1
      %p89 = por %p87, %p88
      %p91 = scmp.ne.s32.totalorder %s74, %s90
      %p92 = scmp.eq.s32.totalorder %s24, 0
      %p93 = por %p91, %p92
      %s95 = sadd.s32 %s94, 1
      %p98 = scmp.eq.s32.totalorder %s18, 1
      %p99 = scmp.ne.s32.totalorder %s94, %s96
      %p100 = scmp.eq.s32.totalorder %s18, 0
      %p101 = por %p99, %p100
      %p102 = scmp.ne.s32.totalorder %s94, %s96
      %p103 = scmp.eq.s32.totalorder %s23, 1
      %p104 = por %p102, %p103
      %p105 = scmp.ne.s32.totalorder %s96, %s97
      %p106 = scmp.eq.s32.totalorder %s23, 0
      %p107 = por %p105, %p106
      %p108 = scmp.ne.s32.totalorder %s96, %s97
      %p109 = scmp.eq.s32.totalorder %s24, 1
      %p110 = por %p108, %p109
      %p112 = scmp.ne.s32.totalorder %s97, %s111
      %p113 = scmp.eq.s32.totalorder %s24, 0
      %p114 = por %p112, %p113
      %s116 = sadd.s32 %s115, 1
      %p119 = scmp.eq.s32.totalorder %s18, 1
      %p120 = scmp.ne.s32.totalorder %s115, %s117
      %p121 = scmp.eq.s32.totalorder %s18, 0
      %p122 = por %p120, %p121
      %p123 = scmp.ne.s32.totalorder %s115, %s117
      %p124 = scmp.eq.s32.totalorder %s23, 1
      %p125 = por %p123, %p124
      %p126 = scmp.ne.s32.totalorder %s117, %s118
      %p127 = scmp.eq.s32.totalorder %s23, 0
      %p128 = por %p126, %p127
      %p129 = scmp.ne.s32.totalorder %s117, %s118
      %p130 = scmp.eq.s32.totalorder %s24, 1
      %p131 = por %p129, %p130
      %p133 = scmp.ne.s32.totalorder %s118, %s132
      %p134 = scmp.eq.s32.totalorder %s24, 0
      %p135 = por %p133, %p134
      %s137 = sadd.s32 %s136, 1
      %p140 = scmp.eq.s32.totalorder %s18, 1
      %p141 = scmp.ne.s32.totalorder %s136, %s138
      %p142 = scmp.eq.s32.totalorder %s18, 0
      %p143 = por %p141, %p142
      %p144 = scmp.ne.s32.totalorder %s136, %s138
      %p145 = scmp.eq.s32.totalorder %s23, 1
      %p146 = por %p144, %p145
      %p147 = scmp.ne.s32.totalorder %s138, %s139
      %p148 = scmp.eq.s32.totalorder %s23, 0
      %p149 = por %p147, %p148
      %p150 = scmp.ne.s32.totalorder %s138, %s139
      %p151 = scmp.eq.s32.totalorder %s24, 1
      %p152 = por %p150, %p151
      %p154 = scmp.ne.s32.totalorder %s139, %s153
      %p155 = scmp.eq.s32.totalorder %s24, 0
      %p156 = por %p154, %p155
      %s158 = sadd.s32 %s157, 1
      %p161 = scmp.eq.s32.totalorder %s18, 1
      %p162 = scmp.ne.s32.totalorder %s157, %s159
      %p163 = scmp.eq.s32.totalorder %s18, 0
      %p164 = por %p162, %p163
      %p165 = scmp.ne.s32.totalorder %s157, %s159
      %p166 = scmp.eq.s32.totalorder %s23, 1
      %p167 = por %p165, %p166
      %p168 = scmp.ne.s32.totalorder %s159, %s160
      %p169 = scmp.eq.s32.totalorder %s23, 0
      %p170 = por %p168, %p169
      %p171 = scmp.ne.s32.totalorder %s159, %s160
      %p172 = scmp.eq.s32.totalorder %s24, 1
      %p173 = por %p171, %p172
      %p175 = scmp.ne.s32.totalorder %s160, %s174
      %p176 = scmp.eq.s32.totalorder %s24, 0
      %p177 = por %p175, %p176
      %s179 = sadd.s32 %s178, 1
      %p182 = scmp.eq.s32.totalorder %s18, 1
      %p183 = scmp.ne.s32.totalorder %s178, %s180
      %p184 = scmp.eq.s32.totalorder %s18, 0
      %p185 = por %p183, %p184
      %p186 = scmp.ne.s32.totalorder %s178, %s180
      %p187 = scmp.eq.s32.totalorder %s23, 1
      %p188 = por %p186, %p187
      %p189 = scmp.ne.s32.totalorder %s180, %s181
      %p190 = scmp.eq.s32.totalorder %s23, 0
      %p191 = por %p189, %p190
      %p192 = scmp.ne.s32.totalorder %s180, %s181
      %p193 = scmp.eq.s32.totalorder %s24, 1
      %p194 = por %p192, %p193
      %p196 = scmp.ne.s32.totalorder %s181, %s195
      %p197 = scmp.eq.s32.totalorder %s24, 0
      %p198 = por %p196, %p197
      %s200 = sadd.s32 %s199, 1
      %p203 = scmp.eq.s32.totalorder %s18, 1
      %p204 = scmp.ne.s32.totalorder %s199, %s201
      %p205 = scmp.eq.s32.totalorder %s18, 0
      %p206 = por %p204, %p205
      %p207 = scmp.ne.s32.totalorder %s199, %s201
      %p208 = scmp.eq.s32.totalorder %s23, 1
      %p209 = por %p207, %p208
      %p210 = scmp.ne.s32.totalorder %s201, %s202
      %p211 = scmp.eq.s32.totalorder %s23, 0
      %p212 = por %p210, %p211
      %p213 = scmp.ne.s32.totalorder %s201, %s202
      %p214 = scmp.eq.s32.totalorder %s24, 1
      %p215 = por %p213, %p214
      %p217 = scmp.ne.s32.totalorder %s202, %s216
      %p218 = scmp.eq.s32.totalorder %s24, 0
      %p219 = por %p217, %p218
      %s221 = sadd.s32 %s220, 1
      %p224 = scmp.eq.s32.totalorder %s18, 1
      %p225 = scmp.ne.s32.totalorder %s220, %s222
      %p226 = scmp.eq.s32.totalorder %s18, 0
      %p227 = por %p225, %p226
      %p228 = scmp.ne.s32.totalorder %s220, %s222
      %p229 = scmp.eq.s32.totalorder %s23, 1
      %p230 = por %p228, %p229
      %p231 = scmp.ne.s32.totalorder %s222, %s223
      %p232 = scmp.eq.s32.totalorder %s23, 0
      %p233 = por %p231, %p232
      %p234 = scmp.ne.s32.totalorder %s222, %s223
      %p235 = scmp.eq.s32.totalorder %s24, 1
      %p236 = por %p234, %p235
      %p238 = scmp.ne.s32.totalorder %s223, %s237
      %p239 = scmp.eq.s32.totalorder %s24, 0
      %p240 = por %p238, %p239
      %s241 = ssub.s32 %s18, %s25
      %p242 = scmp.eq.s32.totalorder %s241, 0
      %s244 = sadd.s32 %s243, 1
      %s245 = scalar_select %p242, %s243, %s244
      %p248 = pneg %p242
      %p249 = scmp.eq.s32.totalorder %s18, 1
      %p250 = por %p248, %p249
      %p251 = scmp.ne.s32.totalorder %s243, %s246
      %p252 = scmp.eq.s32.totalorder %s18, 0
      %p253 = por %p251, %p252
      %p254 = scmp.ne.s32.totalorder %s243, %s246
      %p255 = scmp.eq.s32.totalorder %s23, 1
      %p256 = por %p254, %p255
      %p257 = scmp.ne.s32.totalorder %s246, %s247
      %p258 = scmp.eq.s32.totalorder %s23, 0
      %p259 = por %p257, %p258
      %p260 = scmp.ne.s32.totalorder %s246, %s247
      %p261 = scmp.eq.s32.totalorder %s24, 1
      %p262 = por %p260, %p261
      %p264 = scmp.ne.s32.totalorder %s247, %s263
      %p265 = scmp.eq.s32.totalorder %s24, 0
      %p266 = por %p264, %p265
      %p267 = scmp.le.s32.totalorder 1, %s18
      %p268 = scmp.lt.s32.totalorder %s18, 3
      %p269 = pnand %p267, %p268
      %p270 = pneg %p269
      // Predicated region
      $region9: #{sni_layer.1} parent=5 // pred_check
        _
      $region10: #{sni_layer.1} parent=5 // pred_check_branch
        %272 = sbr.rel (%p269) target = $region12
      $region11: #{sni_layer.1} parent=5 // pred_region
        %s273 = ssub.s32 %s18, 1
        // Predicated region
        $region13: #{sni_layer.1} parent=11 // pred_check
          %p274 = pneg %p39
        $region14: #{sni_layer.1} parent=11 // pred_check_branch
          %276 = sbr.rel (%p274) target = $region16
        $region15: #{sni_layer.1} parent=11 // pred_region
          _
        $region16: #{sni_layer.1} parent=11 // pred_fallthru
          _
        // Predicated region
        $region17: #{sni_layer.1} parent=11 // pred_check
          %p277 = pneg %p60
        $region18: #{sni_layer.1} parent=11 // pred_check_branch
          %279 = sbr.rel (%p277) target = $region20
        $region19: #{sni_layer.1} parent=11 // pred_region
          %s281 = ssub.s32 16, 16
          %282 = vsyncadd [#allocation4], %s281
          %s284 = sshll.u32 %s1, 4
          %s285 = int_to_ptr.vmem [resolvable:$true] %s284
          %287 = dma.vmem_to_smem %s285, 16, [#allocation3], [#allocation4]
        $region20: #{sni_layer.1} parent=11 // pred_fallthru
          _
        // Predicated region
        $region21: #{sni_layer.1} parent=11 // pred_check
          %p288 = pneg %p107
        $region22: #{sni_layer.1} parent=11 // pred_check_branch
          %290 = sbr.rel (%p288) target = $region24
        $region23: #{sni_layer.1} parent=11 // pred_region
          _
        $region24: #{sni_layer.1} parent=11 // pred_fallthru
          _
        // Predicated region
        $region25: #{sni_layer.1} parent=11 // pred_check
          %p291 = pneg %p128
        $region26: #{sni_layer.1} parent=11 // pred_check_branch
          %293 = sbr.rel (%p291) target = $region28
        $region27: #{sni_layer.1} parent=11 // pred_region
          _
        $region28: #{sni_layer.1} parent=11 // pred_fallthru
          _
        // Predicated region
        $region29: #{sni_layer.1} parent=11 // pred_check
          %p294 = pneg %p149
        $region30: #{sni_layer.1} parent=11 // pred_check_branch
          %296 = sbr.rel (%p294) target = $region32
        $region31: #{sni_layer.1} parent=11 // pred_region
          _
        $region32: #{sni_layer.1} parent=11 // pred_fallthru
          _
        // Predicated region
        $region33: #{sni_layer.1} parent=11 // pred_check
          %p297 = pneg %p170
        $region34: #{sni_layer.1} parent=11 // pred_check_branch
          %299 = sbr.rel (%p297) target = $region36
        $region35: #{sni_layer.1} parent=11 // pred_region
          _
        $region36: #{sni_layer.1} parent=11 // pred_fallthru
          _
        // Predicated region
        $region37: #{sni_layer.1} parent=11 // pred_check
          %p300 = pneg %p191
        $region38: #{sni_layer.1} parent=11 // pred_check_branch
          %302 = sbr.rel (%p300) target = $region40
        $region39: #{sni_layer.1} parent=11 // pred_region
          _
        $region40: #{sni_layer.1} parent=11 // pred_fallthru
          _
        // Predicated region
        $region41: #{sni_layer.1} parent=11 // pred_check
          %p303 = pneg %p212
        $region42: #{sni_layer.1} parent=11 // pred_check_branch
          %305 = sbr.rel (%p303) target = $region44
        $region43: #{sni_layer.1} parent=11 // pred_region
          _
        $region44: #{sni_layer.1} parent=11 // pred_fallthru
          _
        // Predicated region
        $region45: #{sni_layer.1} parent=11 // pred_check
          %p306 = pneg %p233
        $region46: #{sni_layer.1} parent=11 // pred_check_branch
          %308 = sbr.rel (%p306) target = $region48
        $region47: #{sni_layer.1} parent=11 // pred_region
          _
        $region48: #{sni_layer.1} parent=11 // pred_fallthru
          _
      $region12: #{sni_layer.1} parent=5 // pred_fallthru
        _
      %p309 = scmp.lt.s32.totalorder %s18, 2
      // Predicated region
      $region49: #{sni_layer.1} parent=5 // pred_check
        %p310 = pneg %p309
      $region50: #{sni_layer.1} parent=5 // pred_check_branch
        %312 = sbr.rel (%p310) target = $region52
      $region51: #{sni_layer.1} parent=5 // pred_region
        // Predicated region
        $region53: #{sni_layer.1} parent=51 // pred_check
          %p313 = pneg %p80
        $region54: #{sni_layer.1} parent=51 // pred_check_branch
          %315 = sbr.rel (%p313) target = $region56
        $region55: #{sni_layer.1} parent=51 // pred_region
          %p316 = scmp.lt.s32.totalorder %s18, 1
          %s317 = scalar_select %p316, %s18, 1
          %s318 = smul.addr %s317, 4
          %s319 = smul.addr %s318, 4
          %s320 = scalar_lea.vmem %s2, %s319
        $region56: #{sni_layer.1} parent=51 // pred_fallthru
          _
      $region52: #{sni_layer.1} parent=5 // pred_fallthru
        _
      %p321 = scmp.le.s32.totalorder 1, %s18
      %p322 = scmp.lt.s32.totalorder %s18, 3
      %p323 = pnand %p321, %p322
      %p324 = pneg %p323
      // Predicated region
      $region57: #{sni_layer.1} parent=5 // pred_check
        _
      $region58: #{sni_layer.1} parent=5 // pred_check_branch
        %326 = sbr.rel (%p323) target = $region60
      $region59: #{sni_layer.1} parent=5 // pred_region
        %s327 = ssub.s32 %s18, 1
        // Predicated region
        $region61: #{sni_layer.1} parent=59 // pred_check
          %p328 = pneg %p60
        $region62: #{sni_layer.1} parent=59 // pred_check_branch
          %330 = sbr.rel (%p328) target = $region64
        $region63: #{sni_layer.1} parent=59 // pred_region
          %331 = dma.done [#allocation4], 16
        $region64: #{sni_layer.1} parent=59 // pred_fallthru
          _
        %332 = sfence
        %p333 = pneg %p39
        %p334 = pneg %p36
        %p335 = pneg %p60
        %p336 = pneg %p57
        %p337 = scmp.lt.s32.totalorder %s23, 1
        %s338 = scalar_select %p337, %s23, 1
        %s339 = smul.addr %s338, 4
        %s340 = smul.addr %s339, 4
        %s341 = scalar_lea.vmem %s2, %s340
        %p342 = pneg %p86
        %p343 = pneg %p83
        %p344 = pneg %p107
        %p345 = pneg %p104
        %p346 = pneg %p128
        %p347 = pneg %p125
        %p348 = pneg %p149
        %p349 = pneg %p146
        %p350 = pneg %p170
        %p351 = pneg %p167
        %p352 = pneg %p191
        %p353 = pneg %p188
        %p354 = pneg %p212
        %p355 = pneg %p209
        %p356 = pneg %p233
        %p357 = pneg %p230
        %p358 = pneg %p259
        %p359 = pneg %p256
        %p360 = scmp.lt.s32.totalorder %s23, 1
        %s361 = scalar_select %p360, %s23, 1
        %s362 = smul.addr %s361, 4
        %s363 = scalar_lea.vmem %s10, %s362
        %p364 = scmp.lt.s32.totalorder %s23, 1
        %s365 = scalar_select %p364, %s23, 1
        %s366 = smul.addr %s365, 4
        %s367 = smul.addr %s366, 4
        %s368 = scalar_lea.vmem %s2, %s367
        %p369 = scmp.lt.s32.totalorder %s23, 1
        %s370 = scalar_select %p369, %s23, 1
        %s371 = smul.addr %s370, 4
        %s372 = scalar_lea.vmem %s10, %s371
        %v374 = vld [vmem:[%s368] sm:$0xf]
        %v375 = vld [vmem:[%s368 + $0x4] sm:$0xf]
        %v376 = vld [vmem:[%s368 + $0x8] sm:$0xf]
        %v377 = vld [vmem:[%s368 + $0xc] sm:$0xf]
        %v378 = vunpack.c.l.bf16 %v374
        %v379 = vunpack.c.l.bf16 %v375
        %v380 = vunpack.c.l.bf16 %v376
        %v381 = vunpack.c.l.bf16 %v377
        %v382 = vld [vmem:[%s3] sm:$0xf]
        %v383 = vld [vmem:[%s3 + $0x4] sm:$0xf]
        %v384 = vld [vmem:[%s3 + $0x8] sm:$0xf]
        %v385 = vld [vmem:[%s3 + $0xc] sm:$0xf]
        %v386 = vld [vmem:[%s4] sm:$0xff]
        %v387 = vld [vmem:[%s4 + $0x8] sm:$0xff]
        %v388 = vld [vmem:[%s4 + $0x10] sm:$0xff]
        %v389 = vld [vmem:[%s4 + $0x18] sm:$0xff]
        %391 = vset.pattern.permute.xlu0 0
        %392 = vperm.xlu0 %391, %v386
        %v393 = vpop.permute.xlu0 %392
        %396 = vset.pattern.permute.xlu0 0
        %397 = vperm.xlu0 %396, %v387
        %v398 = vpop.permute.xlu0 %397
        %401 = vset.pattern.permute.xlu0 0
        %402 = vperm.xlu0 %401, %v388
        %v403 = vpop.permute.xlu0 %402
        %406 = vset.pattern.permute.xlu0 0
        %407 = vperm.xlu0 %406, %v389
        %v408 = vpop.permute.xlu0 %407
        %v414 = vunpack.c.l.b16 %v382
        %v415 = vunpack.c.l.b16 %v383
        %v416 = vunpack.c.l.b16 %v384
        %v417 = vunpack.c.l.b16 %v385
        %v418 = vpack.c.b16 %v415, %v414
        %v419 = vpack.c.b16 %v417, %v416
        %v424 = vunpack.c.l.b16 %v374
        %v425 = vunpack.c.l.b16 %v375
        %v426 = vunpack.c.l.b16 %v376
        %v427 = vunpack.c.l.b16 %v377
        %v428 = vpack.c.b16 %v425, %v424
        %v429 = vpack.c.b16 %v427, %v426
        %vm432 = vcmask 261120
        %v434 = vsel %vm432, %v418, 0
        %v437 = vsel %vm432, %v419, 0
        %439 = vmatprep.subr.bf16.mxu0 0
        %440 = vmatpush1.bf16.msra.mxu0 %v428
        %441 = vmatprep.subr.bf16.mxu0 0
        %442 = vmatpush1.bf16.msra.mxu0 %v429
        %443 = vmatprep.subr.bf16.mxu0 0
        %444 = vmatpush1.bf16.msra.mxu0 0
        %445 = vmatprep.subr.bf16.mxu0 0
        %446 = vmatpush1.bf16.msra.mxu0 0
        %447 = vmatprep.subr.bf16.mxu0 0
        %448 = vmatpush1.bf16.msra.mxu0 0
        %449 = vmatprep.subr.bf16.mxu0 0
        %450 = vmatpush1.bf16.msra.mxu0 0
        %451 = vmatprep.subr.bf16.mxu0 0
        %452 = vmatpush1.bf16.msra.mxu0 0
        %453 = vmatprep.subr.bf16.mxu0 0
        %454 = vmatpush1.bf16.msra.mxu0 0
        %455 = vmatprep.subr.bf16.mxu0 0
        %456 = vmatpush1.bf16.msra.mxu0 0
        %457 = vmatprep.subr.bf16.mxu0 0
        %458 = vmatpush1.bf16.msra.mxu0 0
        %459 = vmatprep.subr.bf16.mxu0 0
        %460 = vmatpush1.bf16.msra.mxu0 0
        %461 = vmatprep.subr.bf16.mxu0 0
        %462 = vmatpush1.bf16.msra.mxu0 0
        %463 = vmatprep.subr.bf16.mxu0 0
        %464 = vmatpush1.bf16.msra.mxu0 0
        %465 = vmatprep.subr.bf16.mxu0 0
        %466 = vmatpush1.bf16.msra.mxu0 0
        %467 = vmatprep.subr.bf16.mxu0 0
        %468 = vmatpush1.bf16.msra.mxu0 0
        %469 = vmatprep.subr.bf16.mxu0 0
        %470 = vmatpush1.bf16.msra.mxu0 0
        %471 = vmatprep.mubr.bf16.mxu0 0
        %472 = vmatmul.mubr.bf16.gmra.mrb[0].mxu0 %v434
        %v473 = vpop.f32.mrb[0].mxu0
        %v474 = vadd.f32 %v393, %v473
        %v475 = vpop.f32.mrb[0].mxu0
        %v476 = vpop.f32.mrb[0].mxu0
        %v477 = vadd.f32 %v398, %v476
        %v478 = vpop.f32.mrb[0].mxu0
        %479 = vmatprep.mubr.bf16.mxu0 0
        %480 = vmatmul.mubr.bf16.gmra.mrb[0].mxu0 %v437
        %v481 = vpop.f32.mrb[0].mxu0
        %v482 = vadd.f32 %v403, %v481
        %v483 = vpop.f32.mrb[0].mxu0
        %v484 = vpop.f32.mrb[0].mxu0
        %v485 = vadd.f32 %v408, %v484
        %v486 = vpop.f32.mrb[0].mxu0
        %487 = vdwg.mxu0
        %v488 = vtanh.pop %v474
        %v489 = vtanh.pop %v477
        %v490 = vtanh.pop %v482
        %v491 = vtanh.pop %v485
        %v492 = vld [vmem:[%s5] sm:$0xff]
        %v493 = vld [vmem:[%s5 + $0x8] sm:$0xff]
        %v494 = vld [vmem:[%s5 + $0x10] sm:$0xff]
        %v495 = vld [vmem:[%s5 + $0x18] sm:$0xff]
        %497 = vset.pattern.permute.xlu0 0
        %498 = vperm.xlu0 %497, %v492
        %v499 = vpop.permute.xlu0 %498
        %502 = vset.pattern.permute.xlu0 0
        %503 = vperm.xlu0 %502, %v493
        %v504 = vpop.permute.xlu0 %503
        %507 = vset.pattern.permute.xlu0 0
        %508 = vperm.xlu0 %507, %v494
        %v509 = vpop.permute.xlu0 %508
        %512 = vset.pattern.permute.xlu0 0
        %513 = vperm.xlu0 %512, %v495
        %v514 = vpop.permute.xlu0 %513
        %v516 = vmul.f32 %v488, %v499
        %v517 = vmul.f32 %v489, %v504
        %v518 = vmul.f32 %v490, %v509
        %v519 = vmul.f32 %v491, %v514
        %vm520 = vcmask 64512
        %v521 = vsel %vm520, %v516, 0.0
        %v522 = vsel %vm520, %v517, 0.0
        %v523 = vadd.f32 %v521, %v522
        %v524 = vsel %vm520, %v518, 0.0
        %v525 = vadd.f32 %v523, %v524
        %v526 = vsel %vm520, %v519, 0.0
        %v527 = vadd.f32 %v525, %v526
        %v528 = vrot.slane %v527, 4
        %v529 = vadd.f32 %v527, %v528
        %v530 = vrot.slane %v529, 2
        %v531 = vadd.f32 %v529, %v530
        %v532 = vrot.slane %v531, 1
        %v533 = vadd.f32 %v531, %v532
        %s534 = sld [smem:[#allocation2]]
        %v535 = vstv %s534
        %v536 = vadd.f32 %v533, %v535
        %v537 = vlaneseq
        %v538 = vand.u32 %v537, 127
        %s539 = sld [smem:[#allocation3 + %s23]]
        %v540 = vstv %s539
        %vm541 = vcmp.lt.s32.totalorder %v538, %v540
        %v542 = vsel %vm541, %v536, -1e+30
        %v543 = vsel %vm520, %v542, -inf
        %544 = vmax.xlane.f32.xlu0 %v543
        %v545 = vpop.xlane.xlu0 %544
        %v546 = vsub.f32 %v542, %v545
        %v547 = vmul.f32 %v546, 1.442695
        %v548 = vpow.pop %v547
        %v549 = vsel %vm520, %v548, 0.0
        %550 = vadd.xlane.f32.xlu0 %v549
        %v551 = vpop.xlane.xlu0 %550
        %v552 = vmul.f32 %v378, %v548
        %v553 = vmul.f32 %v379, %v548
        %v554 = vmul.f32 %v380, %v548
        %v555 = vmul.f32 %v381, %v548
        %v556 = vsel %vm520, %v552, 0.0
        %557 = vadd.xlane.f32.xlu0 %v556
        %v558 = vpop.xlane.xlu0 %557
        %v559 = vsel %vm520, %v553, 0.0
        %560 = vadd.xlane.f32.xlu0 %v559
        %v561 = vpop.xlane.xlu0 %560
        %v562 = vsel %vm520, %v554, 0.0
        %563 = vadd.xlane.f32.xlu0 %v562
        %v564 = vpop.xlane.xlu0 %563
        %v565 = vsel %vm520, %v555, 0.0
        %566 = vadd.xlane.f32.xlu0 %v565
        %v567 = vpop.xlane.xlu0 %566
        %v568 = vrcp.pop %v551
        %v569 = vmul.f32 %v558, %v568
        %v570 = vmul.f32 %v561, %v568
        %v571 = vmul.f32 %v564, %v568
        %v572 = vmul.f32 %v567, %v568
        %v573 = vmul.f32 %v378, %v569
        %v574 = vmul.f32 %v379, %v570
        %v575 = vmul.f32 %v380, %v571
        %v576 = vmul.f32 %v381, %v572
        %v577 = vpack.c.bf16 %v574, %v573
        %v578 = vpack.c.bf16 %v576, %v575
        %v579 = vld [vmem:[%s6] sm:$0xf]
        %v580 = vld [vmem:[%s6 + $0x4] sm:$0xf]
        %v581 = vld [vmem:[%s6 + $0x8] sm:$0xf]
        %v582 = vld [vmem:[%s6 + $0xc] sm:$0xf]
        %v583 = vld [vmem:[%s7] sm:$0xff]
        %v584 = vld [vmem:[%s7 + $0x8] sm:$0xff]
        %v585 = vld [vmem:[%s7 + $0x10] sm:$0xff]
        %v586 = vld [vmem:[%s7 + $0x18] sm:$0xff]
        %588 = vset.pattern.permute.xlu0 0
        %589 = vperm.xlu0 %588, %v583
        %v590 = vpop.permute.xlu0 %589
        %593 = vset.pattern.permute.xlu0 0
        %594 = vperm.xlu0 %593, %v584
        %v595 = vpop.permute.xlu0 %594
        %598 = vset.pattern.permute.xlu0 0
        %599 = vperm.xlu0 %598, %v585
        %v600 = vpop.permute.xlu0 %599
        %603 = vset.pattern.permute.xlu0 0
        %604 = vperm.xlu0 %603, %v586
        %v605 = vpop.permute.xlu0 %604
        %v611 = vunpack.c.l.b16 %v579
        %v612 = vunpack.c.l.b16 %v580
        %v613 = vunpack.c.l.b16 %v581
        %v614 = vunpack.c.l.b16 %v582
        %v615 = vpack.c.b16 %v612, %v611
        %v616 = vpack.c.b16 %v614, %v613
        %v618 = vsel %vm432, %v615, 0
        %v621 = vsel %vm432, %v616, 0
        %623 = vmatprep.subr.bf16.mxu0 0
        %624 = vmatpush1.bf16.msra.mxu0 %v577
        %625 = vmatprep.subr.bf16.mxu0 0
        %626 = vmatpush1.bf16.msra.mxu0 %v578
        %627 = vmatprep.subr.bf16.mxu0 0
        %628 = vmatpush1.bf16.msra.mxu0 0
        %629 = vmatprep.subr.bf16.mxu0 0
        %630 = vmatpush1.bf16.msra.mxu0 0
        %631 = vmatprep.subr.bf16.mxu0 0
        %632 = vmatpush1.bf16.msra.mxu0 0
        %633 = vmatprep.subr.bf16.mxu0 0
        %634 = vmatpush1.bf16.msra.mxu0 0
        %635 = vmatprep.subr.bf16.mxu0 0
        %636 = vmatpush1.bf16.msra.mxu0 0
        %637 = vmatprep.subr.bf16.mxu0 0
        %638 = vmatpush1.bf16.msra.mxu0 0
        %639 = vmatprep.subr.bf16.mxu0 0
        %640 = vmatpush1.bf16.msra.mxu0 0
        %641 = vmatprep.subr.bf16.mxu0 0
        %642 = vmatpush1.bf16.msra.mxu0 0
        %643 = vmatprep.subr.bf16.mxu0 0
        %644 = vmatpush1.bf16.msra.mxu0 0
        %645 = vmatprep.subr.bf16.mxu0 0
        %646 = vmatpush1.bf16.msra.mxu0 0
        %647 = vmatprep.subr.bf16.mxu0 0
        %648 = vmatpush1.bf16.msra.mxu0 0
        %649 = vmatprep.subr.bf16.mxu0 0
        %650 = vmatpush1.bf16.msra.mxu0 0
        %651 = vmatprep.subr.bf16.mxu0 0
        %652 = vmatpush1.bf16.msra.mxu0 0
        %653 = vmatprep.subr.bf16.mxu0 0
        %654 = vmatpush1.bf16.msra.mxu0 0
        %655 = vmatprep.mubr.bf16.mxu0 0
        %656 = vmatmul.mubr.bf16.gmra.mrb[0].mxu0 %v618
        %v657 = vpop.f32.mrb[0].mxu0
        %v658 = vadd.f32 %v590, %v657
        %v659 = vpop.f32.mrb[0].mxu0
        %v660 = vpop.f32.mrb[0].mxu0
        %v661 = vadd.f32 %v595, %v660
        %v662 = vpop.f32.mrb[0].mxu0
        %663 = vmatprep.mubr.bf16.mxu0 0
        %664 = vmatmul.mubr.bf16.gmra.mrb[0].mxu0 %v621
        %v665 = vpop.f32.mrb[0].mxu0
        %v666 = vadd.f32 %v600, %v665
        %v667 = vpop.f32.mrb[0].mxu0
        %v668 = vpop.f32.mrb[0].mxu0
        %v669 = vadd.f32 %v605, %v668
        %v670 = vpop.f32.mrb[0].mxu0
        %671 = vdwg.mxu0
        %v672 = vmax.f32 %v658, 0.0
        %v673 = vmax.f32 %v661, 0.0
        %v674 = vmax.f32 %v666, 0.0
        %v675 = vmax.f32 %v669, 0.0
        %v676 = vld [vmem:[%s8] sm:$0xf]
        %v677 = vpack.c.bf16 %v673, %v672
        %v678 = vpack.c.bf16 %v675, %v674
        %v679 = vld [vmem:[%s9] sm:$0xff]
        %681 = vset.pattern.permute.xlu0 0
        %682 = vperm.xlu0 %681, %v679
        %v683 = vpop.permute.xlu0 %682
        %v686 = vsel %vm432, %v676, 0
        %688 = vmatprep.subr.bf16.mxu0 0
        %689 = vmatpush1.bf16.msra.mxu0 %v677
        %690 = vmatprep.subr.bf16.mxu0 0
        %691 = vmatpush1.bf16.msra.mxu0 %v678
        %692 = vmatprep.subr.bf16.mxu0 0
        %693 = vmatpush1.bf16.msra.mxu0 0
        %694 = vmatprep.subr.bf16.mxu0 0
        %695 = vmatpush1.bf16.msra.mxu0 0
        %696 = vmatprep.subr.bf16.mxu0 0
        %697 = vmatpush1.bf16.msra.mxu0 0
        %698 = vmatprep.subr.bf16.mxu0 0
        %699 = vmatpush1.bf16.msra.mxu0 0
        %700 = vmatprep.subr.bf16.mxu0 0
        %701 = vmatpush1.bf16.msra.mxu0 0
        %702 = vmatprep.subr.bf16.mxu0 0
        %703 = vmatpush1.bf16.msra.mxu0 0
        %704 = vmatprep.subr.bf16.mxu0 0
        %705 = vmatpush1.bf16.msra.mxu0 0
        %706 = vmatprep.subr.bf16.mxu0 0
        %707 = vmatpush1.bf16.msra.mxu0 0
        %708 = vmatprep.subr.bf16.mxu0 0
        %709 = vmatpush1.bf16.msra.mxu0 0
        %710 = vmatprep.subr.bf16.mxu0 0
        %711 = vmatpush1.bf16.msra.mxu0 0
        %712 = vmatprep.subr.bf16.mxu0 0
        %713 = vmatpush1.bf16.msra.mxu0 0
        %714 = vmatprep.subr.bf16.mxu0 0
        %715 = vmatpush1.bf16.msra.mxu0 0
        %716 = vmatprep.subr.bf16.mxu0 0
        %717 = vmatpush1.bf16.msra.mxu0 0
        %718 = vmatprep.subr.bf16.mxu0 0
        %719 = vmatpush1.bf16.msra.mxu0 0
        %720 = vmatprep.mubr.bf16.mxu0 0
        %721 = vmatmul.mubr.bf16.gmra.mrb[0].mxu0 %v686
        %v722 = vpop.f32.mrb[0].mxu0
        %v723 = vadd.f32 %v683, %v722
        %v724 = vpop.f32.mrb[0].mxu0
        %v725 = vpop.f32.mrb[0].mxu0
        %v726 = vpop.f32.mrb[0].mxu0
        %727 = vdwg.mxu0
        %v729 = vrot.slane %v723, 1
        %v731 = vmax.f32 %v723, %v729
        %v732 = vrot.slane %v723, 2
        %v734 = vmax.f32 %v731, %v732
        %v735 = vsub.f32 %v723, %v734
        %v736 = vmul.f32 %v735, 1.442695
        %v737 = vpow.pop %v736
        %v739 = vrot.slane %v734, 7
        %v741 = vsub.f32 %v723, %v739
        %v742 = vmul.f32 %v741, 1.442695
        %v743 = vpow.pop %v742
        %v745 = vrot.slane %v743, 1
        %v747 = vadd.f32 %v737, %v745
        %v748 = vrot.slane %v734, 6
        %v750 = vsub.f32 %v723, %v748
        %v751 = vmul.f32 %v750, 1.442695
        %v752 = vpow.pop %v751
        %v754 = vrot.slane %v752, 2
        %v756 = vadd.f32 %v747, %v754
        %v757 = vlog2.pop %v756
        %v758 = vmul.f32 %v757, 0.6931472
        %v759 = vadd.f32 %v758, %v734
        %v760 = vlaneseq
        %v761 = vshrl.u32 %v760, 7
        %v762 = vsub.s32 0, %v761
        %v763 = vrot.slane %v759, %v762
        %v764 = vsub.f32 %v723, %v763
        %vm765 = vcmask 59392
        %766 = vst.msk [vmem:[%s372] sm:$0x7] %vm765, %v764
        %p767 = scmp.lt.s32.totalorder %s23, 1
        %s768 = scalar_select %p767, %s23, 1
        %s769 = smul.addr %s768, 4
        %s770 = scalar_lea.vmem %s10, %s769
        // Predicated region
        $region65: #{sni_layer.1} parent=59 // pred_check
          %p771 = pneg %p256
        $region66: #{sni_layer.1} parent=59 // pred_check_branch
          %773 = sbr.rel (%p771) target = $region68
        $region67: #{sni_layer.1} parent=59 // pred_region
          _
        $region68: #{sni_layer.1} parent=59 // pred_fallthru
          _
      $region60: #{sni_layer.1} parent=5 // pred_fallthru
        _
      %p774 = scmp.le.s32.totalorder 2, %s18
      // Predicated region
      $region69: #{sni_layer.1} parent=5 // pred_check
        %p775 = pneg %p774
      $region70: #{sni_layer.1} parent=5 // pred_check_branch
        %777 = sbr.rel (%p775) target = $region72
      $region71: #{sni_layer.1} parent=5 // pred_region
        %s778 = ssub.s32 %s18, 2
        // Predicated region
        $region73: #{sni_layer.1} parent=71 // pred_check
          %p779 = pneg %p262
        $region74: #{sni_layer.1} parent=71 // pred_check_branch
          %781 = sbr.rel (%p779) target = $region76
        $region75: #{sni_layer.1} parent=71 // pred_region
          %p782 = scmp.lt.s32.totalorder %s24, 1
          %s783 = scalar_select %p782, %s24, 1
          %s784 = smul.addr %s783, 4
          %s785 = scalar_lea.vmem %s10, %s784
        $region76: #{sni_layer.1} parent=71 // pred_fallthru
          _
      $region72: #{sni_layer.1} parent=5 // pred_fallthru
        _
    $region6: #{sni_layer.1} parent=1 // loop_footer
      %s22 = sadd.s32 1, %s18
    $region7: #{sni_layer.1} parent=1 // loop_footer_branch
      %17 = sbr.rel target = $region3
    $region8: #{sni_layer.1} parent=1 // loop_exit
      _
    %786 = vsyncpa [#allocation4], 1
    %s787 = scalar_lea.sflag [#allocation4], 1
    %788 = vsyncpa %s787, 1

</llo_original>
